<compile_context>
chip_gen: v6e
topology: v6e:2x2x1
jax: 0.10.0
libtpu: 0.0.40
codegen_flags: <defaults>
</compile_context>

<pallas_src>
import jax
import jax.numpy as jnp
from jax.experimental import pallas as pl
from jax.experimental.pallas import tpu as pltpu


# --------------------------------------------------------------------------- #
# Kernel
# --------------------------------------------------------------------------- #
def encoder_kernel(x_ref,
                   w1_ref, b1_ref,
                   w2_ref, b2_ref,
                   w3_ref, b3_ref,
                   wh_ref, bh_ref,
                   out_ref):
    # fc1 + (folded) bn1 + relu   (bf16 inputs, f32 accumulation; K=in_dim)
    h = jnp.dot(x_ref[...], w1_ref[...], preferred_element_type=jnp.float32)
    h = jnp.maximum(h + b1_ref[...], 0.0).astype(jnp.bfloat16)
    # fc2 + (folded) bn2 + relu
    h = jnp.dot(h, w2_ref[...], preferred_element_type=jnp.float32)
    h = jnp.maximum(h + b2_ref[...], 0.0).astype(jnp.bfloat16)
    # fc3 + (folded) bn3 + relu
    h = jnp.dot(h, w3_ref[...], preferred_element_type=jnp.float32)
    h = jnp.maximum(h + b3_ref[...], 0.0).astype(jnp.bfloat16)
    # dropout(p=0.3): identity in eval mode
    # fused + lane-padded heads: [fc_mean | fc_log_var | 0-pad] -> one
    # unmasked lane-dense store
    out = jnp.dot(h, wh_ref[...], preferred_element_type=jnp.float32) + bh_ref[...]
    out_ref[...] = out.astype(out_ref.dtype)


# --------------------------------------------------------------------------- #
# Helpers
# --------------------------------------------------------------------------- #
def _round_up(n, m):
    return (n + m - 1) // m * m


def _choose_batch_tile(B, block_b):
    """Pick (bb, B_pad) s.t. bb | B_pad, bb <= block_b, >=2 grid steps when
    possible (keeps both v7x TensorCores busy; harmless on v5e/v6e), and
    tail-padding waste is bounded to ~10%."""
    B8 = _round_up(B, 8)
    align = 16 if B8 >= 16 else 8          # 16 packs bf16 sublanes cleanly
    min_steps = 2 if B8 >= 2 * align else 1
    n_steps = max(min_steps, pl.cdiv(B8, block_b))
    while True:
        bb = _round_up(pl.cdiv(B8, n_steps), align)
        B_pad = _round_up(B8, bb)
        if (B_pad - B8) <= max(align, B_pad // 10) or bb == align:
            break
        n_steps += 1
    return bb, B_pad


def prepare_params(params, latent_dim):
    """One-time weight preprocessing (hoisted out of the per-call path):
    bf16 casts, head fusion (wm||wv) and lane padding to a multiple of 128."""
    dh = 2 * latent_dim
    dh_pad = max(128, _round_up(dh, 128))

    wh = jnp.concatenate([params["wm"], params["wv"]], axis=1)   # (128, 2*latent)
    bh = jnp.concatenate([params["bm"], params["bv"]], axis=1)   # (1, 2*latent)
    if dh_pad != dh:
        wh = jnp.pad(wh, ((0, 0), (0, dh_pad - dh)))
        bh = jnp.pad(bh, ((0, 0), (0, dh_pad - dh)))

    return {
        "w1": params["w1"].astype(jnp.bfloat16), "b1": params["b1"],
        "w2": params["w2"].astype(jnp.bfloat16), "b2": params["b2"],
        "w3": params["w3"].astype(jnp.bfloat16), "b3": params["b3"],
        "wh": wh.astype(jnp.bfloat16),           "bh": bh,
        "latent_dim": latent_dim,
        "dh_pad": dh_pad,
    }


# --------------------------------------------------------------------------- #
# Wrapper
# --------------------------------------------------------------------------- #
def encoder_forward(x, prep, *, block_b=2048, out_dtype=jnp.float32):
    """x: (B, input_dim) f32.  prep: output of prepare_params().
    Returns (mean, log_var), each (B, latent_dim)."""
    B, in_dim = x.shape
    latent_dim = prep["latent_dim"]
    dh_pad = prep["dh_pad"]

    w1, b1 = prep["w1"], prep["b1"]
    w2, b2 = prep["w2"], prep["b2"]
    w3, b3 = prep["w3"], prep["b3"]
    wh, bh = prep["wh"], prep["bh"]
    d1, d2, d3 = w1.shape[1], w2.shape[1], w3.shape[1]

    # --- batch tiling (adaptive; >=2 steps when possible) ---------------------
    bb, B_pad = _choose_batch_tile(B, block_b)
    xp = x.astype(jnp.bfloat16)
    if B_pad != B:
        xp = jnp.pad(xp, ((0, B_pad - B), (0, 0)))
    grid = (B_pad // bb,)

    def const_spec(shape):
        # weights / biases: same block every grid step -> stay resident in VMEM
        return pl.BlockSpec(shape, lambda i: (0, 0))

    flops = 2 * B_pad * (in_dim * d1 + d1 * d2 + d2 * d3 + d3 * dh_pad)
    bytes_accessed = int(
        xp.size * 2
        + (w1.size + w2.size + w3.size + wh.size) * 2
        + (b1.size + b2.size + b3.size + bh.size) * 4
        + B_pad * dh_pad * jnp.dtype(out_dtype).itemsize
    )

    out = pl.pallas_call(
        encoder_kernel,
        out_shape=jax.ShapeDtypeStruct((B_pad, dh_pad), out_dtype),
        grid=grid,
        in_specs=[
            # x: full-extent (unpadded) K dim — no HBM-side K padding
            pl.BlockSpec((bb, in_dim), lambda i: (i, 0)),
            const_spec(w1.shape), const_spec((1, d1)),
            const_spec(w2.shape), const_spec((1, d2)),
            const_spec(w3.shape), const_spec((1, d3)),
            const_spec(wh.shape), const_spec((1, dh_pad)),
        ],
        out_specs=pl.BlockSpec((bb, dh_pad), lambda i: (i, 0)),
        compiler_params=pltpu.CompilerParams(
            dimension_semantics=("parallel",)),
        cost_estimate=pl.CostEstimate(
            flops=flops, transcendentals=0, bytes_accessed=bytes_accessed),
    )(xp, w1, b1, w2, b2, w3, b3, wh, bh)

    out = out[:B]
    return out[:, :latent_dim], out[:, latent_dim:2 * latent_dim]


# --------------------------------------------------------------------------- #
# Parameter construction (BN folded into Linear) + pure-JAX reference
# --------------------------------------------------------------------------- #
def fold_bn(w, b, gamma, beta, mean, var, eps=1e-5):
    """Fold eval-mode BatchNorm1d into the preceding Linear (exact)."""
    scale = gamma / jnp.sqrt(var + eps)          # (F_out,)
    w_eff = w * scale[None, :]                   # (F_in, F_out)
    b_eff = (b - mean) * scale + beta            # (F_out,)
    return w_eff, b_eff


def make_params(key, input_dim, latent_dim):
    ks = jax.random.split(key, 19)

    def lin(kw, kb, fin, fout):
        # PyTorch-like uniform(-1/sqrt(fin), 1/sqrt(fin)) init, (F_in, F_out)
        bound = 1.0 / jnp.sqrt(fin)
        w = jax.random.uniform(kw, (fin, fout), jnp.float32, -bound, bound)
        b = jax.random.uniform(kb, (fout,), jnp.float32, -bound, bound)
        return w, b

    w1, b1 = lin(ks[0], ks[1], input_dim, 512)
    w2, b2 = lin(ks[2], ks[3], 512, 256)
    w3, b3 = lin(ks[4], ks[5], 256, 128)
    wm, bm = lin(ks[6], ks[7], 128, latent_dim)
    wv, bv = lin(ks[8], ks[9], 128, latent_dim)

    def bn(kg, kb_, km, n):
        gamma = 1.0 + 0.1 * jax.random.normal(kg, (n,), jnp.float32)
        beta = 0.1 * jax.random.normal(kb_, (n,), jnp.float32)
        mean = 0.05 * jax.random.normal(km, (n,), jnp.float32)
        var = jnp.ones((n,), jnp.float32) * 1.2
        return gamma, beta, mean, var

    g1, be1, m1, v1 = bn(ks[10], ks[11], ks[12], 512)
    g2, be2, m2, v2 = bn(ks[13], ks[14], ks[15], 256)
    g3, be3, m3, v3 = bn(ks[16], ks[17], ks[18], 128)

    w1f, b1f = fold_bn(w1, b1, g1, be1, m1, v1)
    w2f, b2f = fold_bn(w2, b2, g2, be2, m2, v2)
    w3f, b3f = fold_bn(w3, b3, g3, be3, m3, v3)

    return {
        "w1": w1f, "b1": b1f.reshape(1, -1),
        "w2": w2f, "b2": b2f.reshape(1, -1),
        "w3": w3f, "b3": b3f.reshape(1, -1),
        "wm": wm, "bm": bm.reshape(1, -1),
        "wv": wv, "bv": bv.reshape(1, -1),
    }


def encoder_ref(x, p):
    """Pure-JAX reference with the same bf16-input / f32-accum numerics."""
    def mm(a, w):
        return jnp.dot(a.astype(jnp.bfloat16), w.astype(jnp.bfloat16),
                       preferred_element_type=jnp.float32)
    h = jnp.maximum(mm(x, p["w1"]) + p["b1"], 0.0)
    h = jnp.maximum(mm(h, p["w2"]) + p["b2"], 0.0)
    h = jnp.maximum(mm(h, p["w3"]) + p["b3"], 0.0)
    return mm(h, p["wm"]) + p["bm"], mm(h, p["wv"]) + p["bv"]


# --------------------------------------------------------------------------- #
# Self-test
# --------------------------------------------------------------------------- #
if __name__ == "__main__":
    key = jax.random.PRNGKey(0)
    k_x, k_x2, k_p = jax.random.split(key, 3)

    input_dim, latent_dim = 32, 64
    params = make_params(k_p, input_dim, latent_dim)
    prep = prepare_params(params, latent_dim)      # one-time weight prep

    # Small case: single grid step (B too small to split).
    B = 8
    x = jax.random.normal(k_x, (B, input_dim), jnp.float32)
    mean, log_var = encoder_forward(x, prep)
    jax.block_until_ready((mean, log_var))

    mean_ref, log_var_ref = encoder_ref(x, params)
    assert mean.shape == (B, latent_dim) and log_var.shape == (B, latent_dim)
    assert jnp.allclose(mean, mean_ref, atol=1e-2, rtol=1e-2)
    assert jnp.allclose(log_var, log_var_ref, atol=1e-2, rtol=1e-2)

    # Larger case: exercises the adaptive batch grid (>=2 steps) + tail padding.
    B2 = 300
    x2 = jax.random.normal(k_x2, (B2, input_dim), jnp.float32)
    mean2, log_var2 = encoder_forward(x2, prep, block_b=128)
    jax.block_until_ready((mean2, log_var2))

    mean2_ref, log_var2_ref = encoder_ref(x2, params)
    assert mean2.shape == (B2, latent_dim) and log_var2.shape == (B2, latent_dim)
    assert jnp.allclose(mean2, mean2_ref, atol=1e-2, rtol=1e-2)
    assert jnp.allclose(log_var2, log_var2_ref, atol=1e-2, rtol=1e-2)

    # Default (large-tile) path as well.
    mean3, log_var3 = encoder_forward(x2, prep)
    jax.block_until_ready((mean3, log_var3))
    assert jnp.allclose(mean3, mean2_ref, atol=1e-2, rtol=1e-2)
    assert jnp.allclose(log_var3, log_var2_ref, atol=1e-2, rtol=1e-2)

    print("KERNEL_OK")
</pallas_src>

<mosaic_0001>
module attributes {stable_mosaic.version = 11 : i64} {
  func.func @encoder_kernel(%arg0: i32, %arg1: memref<8x32xbf16, #tpu.memory_space<vmem>>, %arg2: memref<32x512xbf16, #tpu.memory_space<vmem>>, %arg3: memref<1x512xf32, #tpu.memory_space<vmem>>, %arg4: memref<512x256xbf16, #tpu.memory_space<vmem>>, %arg5: memref<1x256xf32, #tpu.memory_space<vmem>>, %arg6: memref<256x128xbf16, #tpu.memory_space<vmem>>, %arg7: memref<1x128xf32, #tpu.memory_space<vmem>>, %arg8: memref<128x128xbf16, #tpu.memory_space<vmem>>, %arg9: memref<1x128xf32, #tpu.memory_space<vmem>>, %arg10: memref<8x128xf32, #tpu.memory_space<vmem>>) attributes {dimension_semantics = [#tpu.dimension_semantics<parallel>], iteration_bounds = array<i64: 1>, scalar_prefetch = 0 : i64, scratch_operands = 0 : i64, tpu.core_type = #tpu.core_type<tc>, window_params = [{transform_indices = @transform_0, window_bounds = array<i64: 8, 32>}, {pipeline_mode = #tpu.pipeline_mode<synchronous>, transform_indices = @transform_1, window_bounds = array<i64: 32, 512>}, {pipeline_mode = #tpu.pipeline_mode<synchronous>, transform_indices = @transform_2, window_bounds = array<i64: 1, 512>}, {pipeline_mode = #tpu.pipeline_mode<synchronous>, transform_indices = @transform_3, window_bounds = array<i64: 512, 256>}, {pipeline_mode = #tpu.pipeline_mode<synchronous>, transform_indices = @transform_4, window_bounds = array<i64: 1, 256>}, {pipeline_mode = #tpu.pipeline_mode<synchronous>, transform_indices = @transform_5, window_bounds = array<i64: 256, 128>}, {pipeline_mode = #tpu.pipeline_mode<synchronous>, transform_indices = @transform_6, window_bounds = array<i64: 1, 128>}, {pipeline_mode = #tpu.pipeline_mode<synchronous>, transform_indices = @transform_7, window_bounds = array<i64: 128, 128>}, {pipeline_mode = #tpu.pipeline_mode<synchronous>, transform_indices = @transform_8, window_bounds = array<i64: 1, 128>}, {transform_indices = @transform_9, window_bounds = array<i64: 8, 128>}]} {
    %c0 = arith.constant 0 : index
    %c0_0 = arith.constant 0 : index
    %0 = vector.load %arg1[%c0, %c0_0] : memref<8x32xbf16, #tpu.memory_space<vmem>>, vector<8x32xbf16>
    %c0_1 = arith.constant 0 : index
    %c0_2 = arith.constant 0 : index
    %1 = vector.load %arg2[%c0_1, %c0_2] : memref<32x512xbf16, #tpu.memory_space<vmem>>, vector<32x512xbf16>
    %cst = arith.constant dense<0.000000e+00> : vector<8x512xf32>
    %2 = tpu.matmul %0, %1, %cst {dimension_numbers = #tpu.dot_dimension_numbers<[1], [0], [0], [1], [0, 0, 1, 1], [], []>} : vector<8x32xbf16>, vector<32x512xbf16>, vector<8x512xf32> -> vector<8x512xf32>
    %c0_3 = arith.constant 0 : index
    %c0_4 = arith.constant 0 : index
    %3 = vector.load %arg3[%c0_3, %c0_4] : memref<1x512xf32, #tpu.memory_space<vmem>>, vector<1x512xf32>
    %4 = vector.broadcast %3 : vector<1x512xf32> to vector<8x512xf32>
    %5 = arith.addf %2, %4 : vector<8x512xf32>
    %cst_5 = arith.constant 0.000000e+00 : f32
    %6 = vector.broadcast %cst_5 : f32 to vector<8x512xf32>
    %7 = arith.maximumf %5, %6 : vector<8x512xf32>
    %8 = arith.truncf %7 : vector<8x512xf32> to vector<8x512xbf16>
    %c0_6 = arith.constant 0 : index
    %c0_7 = arith.constant 0 : index
    %9 = vector.load %arg4[%c0_6, %c0_7] : memref<512x256xbf16, #tpu.memory_space<vmem>>, vector<512x256xbf16>
    %cst_8 = arith.constant dense<0.000000e+00> : vector<8x256xf32>
    %10 = tpu.matmul %8, %9, %cst_8 {dimension_numbers = #tpu.dot_dimension_numbers<[1], [0], [0], [1], [0, 0, 1, 1], [], []>} : vector<8x512xbf16>, vector<512x256xbf16>, vector<8x256xf32> -> vector<8x256xf32>
    %c0_9 = arith.constant 0 : index
    %c0_10 = arith.constant 0 : index
    %11 = vector.load %arg5[%c0_9, %c0_10] : memref<1x256xf32, #tpu.memory_space<vmem>>, vector<1x256xf32>
    %12 = vector.broadcast %11 : vector<1x256xf32> to vector<8x256xf32>
    %13 = arith.addf %10, %12 : vector<8x256xf32>
    %cst_11 = arith.constant 0.000000e+00 : f32
    %14 = vector.broadcast %cst_11 : f32 to vector<8x256xf32>
    %15 = arith.maximumf %13, %14 : vector<8x256xf32>
    %16 = arith.truncf %15 : vector<8x256xf32> to vector<8x256xbf16>
    %c0_12 = arith.constant 0 : index
    %c0_13 = arith.constant 0 : index
    %17 = vector.load %arg6[%c0_12, %c0_13] : memref<256x128xbf16, #tpu.memory_space<vmem>>, vector<256x128xbf16>
    %cst_14 = arith.constant dense<0.000000e+00> : vector<8x128xf32>
    %18 = tpu.matmul %16, %17, %cst_14 {dimension_numbers = #tpu.dot_dimension_numbers<[1], [0], [0], [1], [0, 0, 1, 1], [], []>} : vector<8x256xbf16>, vector<256x128xbf16>, vector<8x128xf32> -> vector<8x128xf32>
    %c0_15 = arith.constant 0 : index
    %c0_16 = arith.constant 0 : index
    %19 = vector.load %arg7[%c0_15, %c0_16] : memref<1x128xf32, #tpu.memory_space<vmem>>, vector<1x128xf32>
    %20 = vector.broadcast %19 : vector<1x128xf32> to vector<8x128xf32>
    %21 = arith.addf %18, %20 : vector<8x128xf32>
    %cst_17 = arith.constant 0.000000e+00 : f32
    %22 = vector.broadcast %cst_17 : f32 to vector<8x128xf32>
    %23 = arith.maximumf %21, %22 : vector<8x128xf32>
    %24 = arith.truncf %23 : vector<8x128xf32> to vector<8x128xbf16>
    %c0_18 = arith.constant 0 : index
    %c0_19 = arith.constant 0 : index
    %25 = vector.load %arg8[%c0_18, %c0_19] : memref<128x128xbf16, #tpu.memory_space<vmem>>, vector<128x128xbf16>
    %cst_20 = arith.constant dense<0.000000e+00> : vector<8x128xf32>
    %26 = tpu.matmul %24, %25, %cst_20 {dimension_numbers = #tpu.dot_dimension_numbers<[1], [0], [0], [1], [0, 0, 1, 1], [], []>} : vector<8x128xbf16>, vector<128x128xbf16>, vector<8x128xf32> -> vector<8x128xf32>
    %c0_21 = arith.constant 0 : index
    %c0_22 = arith.constant 0 : index
    %27 = vector.load %arg9[%c0_21, %c0_22] : memref<1x128xf32, #tpu.memory_space<vmem>>, vector<1x128xf32>
    %28 = vector.broadcast %27 : vector<1x128xf32> to vector<8x128xf32>
    %29 = arith.addf %26, %28 : vector<8x128xf32>
    %c0_23 = arith.constant 0 : index
    %c0_24 = arith.constant 0 : index
    %30 = vector.load %arg10[%c0_23, %c0_24] : memref<8x128xf32, #tpu.memory_space<vmem>>, vector<8x128xf32>
    tpu.vector_store %arg10[%c0_23, %c0_24], %29 {strides = array<i32>} : memref<8x128xf32, #tpu.memory_space<vmem>>, vector<8x128xf32>,
    return
  }
  func.func @transform_0(%arg0: i32) -> (i32, i32) {
    %c0_i32 = arith.constant 0 : i32
    %c0_i32_0 = arith.constant 0 : i32
    return %arg0, %c0_i32 : i32, i32
  }
  func.func @transform_1(%arg0: i32) -> (i32, i32) {
    %c0_i32 = arith.constant 0 : i32
    %c0_i32_0 = arith.constant 0 : i32
    %c0_i32_1 = arith.constant 0 : i32
    return %c0_i32, %c0_i32_0 : i32, i32
  }
  func.func @transform_2(%arg0: i32) -> (i32, i32) {
    %c0_i32 = arith.constant 0 : i32
    %c0_i32_0 = arith.constant 0 : i32
    %c0_i32_1 = arith.constant 0 : i32
    return %c0_i32, %c0_i32_0 : i32, i32
  }
  func.func @transform_3(%arg0: i32) -> (i32, i32) {
    %c0_i32 = arith.constant 0 : i32
    %c0_i32_0 = arith.constant 0 : i32
    %c0_i32_1 = arith.constant 0 : i32
    return %c0_i32, %c0_i32_0 : i32, i32
  }
  func.func @transform_4(%arg0: i32) -> (i32, i32) {
    %c0_i32 = arith.constant 0 : i32
    %c0_i32_0 = arith.constant 0 : i32
    %c0_i32_1 = arith.constant 0 : i32
    return %c0_i32, %c0_i32_0 : i32, i32
  }
  func.func @transform_5(%arg0: i32) -> (i32, i32) {
    %c0_i32 = arith.constant 0 : i32
    %c0_i32_0 = arith.constant 0 : i32
    %c0_i32_1 = arith.constant 0 : i32
    return %c0_i32, %c0_i32_0 : i32, i32
  }
  func.func @transform_6(%arg0: i32) -> (i32, i32) {
    %c0_i32 = arith.constant 0 : i32
    %c0_i32_0 = arith.constant 0 : i32
    %c0_i32_1 = arith.constant 0 : i32
    return %c0_i32, %c0_i32_0 : i32, i32
  }
  func.func @transform_7(%arg0: i32) -> (i32, i32) {
    %c0_i32 = arith.constant 0 : i32
    %c0_i32_0 = arith.constant 0 : i32
    %c0_i32_1 = arith.constant 0 : i32
    return %c0_i32, %c0_i32_0 : i32, i32
  }
  func.func @transform_8(%arg0: i32) -> (i32, i32) {
    %c0_i32 = arith.constant 0 : i32
    %c0_i32_0 = arith.constant 0 : i32
    %c0_i32_1 = arith.constant 0 : i32
    return %c0_i32, %c0_i32_0 : i32, i32
  }
  func.func @transform_9(%arg0: i32) -> (i32, i32) {
    %c0_i32 = arith.constant 0 : i32
    %c0_i32_0 = arith.constant 0 : i32
    return %arg0, %c0_i32 : i32, i32
  }
}

</mosaic_0001>

<llo_original>
// kernel: tpu_custom_call.1
$region0: #{tpu_custom_call.1}
  #allocation0 [shape = 'u32[]', space=smem, size = 0x4, offset = 0x4, fixed_abs, tag = 'smem constant byte address 0x4 - core index']
  #allocation1 [shape = 'u32[144,128]{1,0:T(1,128)}', space=vmem, size = 0x12000, scoped, tag = 'internal scratch']
  %s0 = inlined_call_operand.hbm [shape: bf16[8,32], index: 0, kind: input, shape index: {}]
  %s1 = inlined_call_operand.hbm [shape: bf16[32,512], index: 1, kind: input, shape index: {}]
  %s2 = inlined_call_operand.hbm [shape: f32[1,512], index: 2, kind: input, shape index: {}]
  %s3 = inlined_call_operand.hbm [shape: bf16[512,256], index: 3, kind: input, shape index: {}]
  %s4 = inlined_call_operand.vmem [shape: f32[1,256], index: 4, kind: input, shape index: {}]
  %s5 = inlined_call_operand.hbm [shape: bf16[256,128], index: 5, kind: input, shape index: {}]
  %s6 = inlined_call_operand.vmem [shape: f32[1,128], index: 6, kind: input, shape index: {}]
  %s7 = inlined_call_operand.hbm [shape: bf16[128,128], index: 7, kind: input, shape index: {}]
  %s8 = inlined_call_operand.vmem [shape: f32[1,128], index: 8, kind: input, shape index: {}]
  %s9 = inlined_call_operand.hbm [shape: f32[8,128], index: 9, kind: output, shape index: {}]
  %s10 = sld [smem:[#allocation0]]
  $region70: #{tpu_custom_call.1} parent=0
    _
  %s12 = ssub.s32 1, %s10
  %s13 = scalar_select 0, %s12, %s10
  $region1: #{tpu_custom_call.1} parent=0
    #allocation2 [shape = 'u8[2048]{0}', space=vmem, size = 0x800, scoped, tag = 'input window, operand 0, single buffered']
    #allocation3 [shape = 's32[1]{0}', space=sflag, size = 0x4, scoped, tag = 'scoped memory for tpu_custom_call.1']
    #allocation4 [shape = 's32[1]{0}', space=sflag, size = 0x4, scoped, tag = 'scoped memory for tpu_custom_call.1']
    #allocation5 [shape = 'u8[32768]{0}', space=vmem, size = 0x8000, scoped, tag = 'input window, operand 1, single buffered']
    #allocation6 [shape = 's32[1]{0}', space=sflag, size = 0x4, scoped, tag = 'scoped memory for tpu_custom_call.1']
    #allocation7 [shape = 'u8[2048]{0}', space=vmem, size = 0x800, scoped, tag = 'input window, operand 2, single buffered']
    #allocation8 [shape = 'u8[262144]{0}', space=vmem, size = 0x40000, scoped, tag = 'input window, operand 3, single buffered']
    #allocation9 [shape = 's32[1]{0}', space=sflag, size = 0x4, scoped, tag = 'scoped memory for tpu_custom_call.1']
    #allocation10 [shape = 'u8[65536]{0}', space=vmem, size = 0x10000, scoped, tag = 'input window, operand 5, single buffered']
    #allocation11 [shape = 'u8[32768]{0}', space=vmem, size = 0x8000, scoped, tag = 'input window, operand 7, single buffered']
    #allocation12 [shape = 's32[1]{0}', space=sflag, size = 0x4, scoped, tag = 'scoped memory for tpu_custom_call.1']
    #allocation13 [shape = 'u8[4096]{0}', space=vmem, size = 0x1000, scoped, tag = 'output window, operand 0, single buffered']
    %14 = vsyncpa [#allocation3], 0
    %15 = vsyncpa [#allocation6], 0
    %16 = vsyncpa [#allocation9], 0
    %17 = vsyncpa [#allocation12], 0
    %18 = vsyncpa [#allocation4], 0
    // Predicated region
    $region2: #{tpu_custom_call.1} parent=1 // pred_check
      _
    $region3: #{tpu_custom_call.1} parent=1 // pred_check_branch
      %20 = sbr.rel (0) target = $region5
    $region4: #{tpu_custom_call.1} parent=1 // pred_region
      %s22 = ssub.s32 64, 64
      %23 = vsyncadd [#allocation3], %s22
      %s25 = sshll.u32 [#allocation2], 4
      %s26 = int_to_ptr.vmem [resolvable:$true] %s25
      %28 = dma.hbm_to_vmem [thread:$0]  %s0, 64, %s26, [#allocation3]
    $region5: #{tpu_custom_call.1} parent=1 // pred_fallthru
      _
    // Predicated region
    $region6: #{tpu_custom_call.1} parent=1 // pred_check
      _
    $region7: #{tpu_custom_call.1} parent=1 // pred_check_branch
      %30 = sbr.rel (0) target = $region9
    $region8: #{tpu_custom_call.1} parent=1 // pred_region
      %s32 = ssub.s32 1024, 1024
      %33 = vsyncadd [#allocation6], %s32
      %s34 = sshll.u32 [#allocation5], 4
      %s35 = int_to_ptr.vmem [resolvable:$true] %s34
      %40 = dma.hbm_to_vmem [thread:$0]  %s1, 1024, %s35, [#allocation6], 256, 256, 16
    $region9: #{tpu_custom_call.1} parent=1 // pred_fallthru
      _
    // Predicated region
    $region10: #{tpu_custom_call.1} parent=1 // pred_check
      _
    $region11: #{tpu_custom_call.1} parent=1 // pred_check_branch
      %42 = sbr.rel (0) target = $region13
    $region12: #{tpu_custom_call.1} parent=1 // pred_region
      %s44 = ssub.s32 64, 64
      %45 = vsyncadd [#allocation6], %s44
      %s47 = sshll.u32 [#allocation7], 4
      %s48 = int_to_ptr.vmem [resolvable:$true] %s47
      %50 = dma.hbm_to_vmem [thread:$0]  %s2, 64, %s48, [#allocation6]
    $region13: #{tpu_custom_call.1} parent=1 // pred_fallthru
      _
    // Predicated region
    $region14: #{tpu_custom_call.1} parent=1 // pred_check
      _
    $region15: #{tpu_custom_call.1} parent=1 // pred_check_branch
      %52 = sbr.rel (0) target = $region17
    $region16: #{tpu_custom_call.1} parent=1 // pred_region
      %s54 = ssub.s32 8192, 8192
      %55 = vsyncadd [#allocation9], %s54
      %s56 = sshll.u32 [#allocation8], 4
      %s57 = int_to_ptr.vmem [resolvable:$true] %s56
      %62 = dma.hbm_to_vmem [thread:$0]  %s3, 8192, %s57, [#allocation9], 128, 128, 8
    $region17: #{tpu_custom_call.1} parent=1 // pred_fallthru
      _
    // Predicated region
    $region18: #{tpu_custom_call.1} parent=1 // pred_check
      _
    $region19: #{tpu_custom_call.1} parent=1 // pred_check_branch
      %64 = sbr.rel (0) target = $region21
    $region20: #{tpu_custom_call.1} parent=1 // pred_region
      _
    $region21: #{tpu_custom_call.1} parent=1 // pred_fallthru
      _
    // Predicated region
    $region22: #{tpu_custom_call.1} parent=1 // pred_check
      _
    $region23: #{tpu_custom_call.1} parent=1 // pred_check_branch
      %66 = sbr.rel (0) target = $region25
    $region24: #{tpu_custom_call.1} parent=1 // pred_region
      %s68 = ssub.s32 2048, 2048
      %69 = vsyncadd [#allocation9], %s68
      %s70 = sshll.u32 [#allocation10], 4
      %s71 = int_to_ptr.vmem [resolvable:$true] %s70
      %76 = dma.hbm_to_vmem [thread:$0]  %s5, 2048, %s71, [#allocation9], 64, 64, 4
    $region25: #{tpu_custom_call.1} parent=1 // pred_fallthru
      _
    // Predicated region
    $region26: #{tpu_custom_call.1} parent=1 // pred_check
      _
    $region27: #{tpu_custom_call.1} parent=1 // pred_check_branch
      %78 = sbr.rel (0) target = $region29
    $region28: #{tpu_custom_call.1} parent=1 // pred_region
      _
    $region29: #{tpu_custom_call.1} parent=1 // pred_fallthru
      _
    // Predicated region
    $region30: #{tpu_custom_call.1} parent=1 // pred_check
      _
    $region31: #{tpu_custom_call.1} parent=1 // pred_check_branch
      %80 = sbr.rel (0) target = $region33
    $region32: #{tpu_custom_call.1} parent=1 // pred_region
      %s82 = ssub.s32 1024, 1024
      %83 = vsyncadd [#allocation12], %s82
      %s84 = sshll.u32 [#allocation11], 4
      %s85 = int_to_ptr.vmem [resolvable:$true] %s84
      %90 = dma.hbm_to_vmem [thread:$0]  %s7, 1024, %s85, [#allocation12], 64, 64, 4
    $region33: #{tpu_custom_call.1} parent=1 // pred_fallthru
      _
    // Predicated region
    $region34: #{tpu_custom_call.1} parent=1 // pred_check
      _
    $region35: #{tpu_custom_call.1} parent=1 // pred_check_branch
      %92 = sbr.rel (0) target = $region37
    $region36: #{tpu_custom_call.1} parent=1 // pred_region
      _
    $region37: #{tpu_custom_call.1} parent=1 // pred_fallthru
      _
    // Predicated region
    $region38: #{tpu_custom_call.1} parent=1 // pred_check
      _
    $region39: #{tpu_custom_call.1} parent=1 // pred_check_branch
      %94 = sbr.rel (0) target = $region41
    $region40: #{tpu_custom_call.1} parent=1 // pred_region
      %95 = dma.done [#allocation3], 64
    $region41: #{tpu_custom_call.1} parent=1 // pred_fallthru
      _
    // Predicated region
    $region42: #{tpu_custom_call.1} parent=1 // pred_check
      _
    $region43: #{tpu_custom_call.1} parent=1 // pred_check_branch
      %97 = sbr.rel (0) target = $region45
    $region44: #{tpu_custom_call.1} parent=1 // pred_region
      %98 = dma.done [#allocation6], 1024
    $region45: #{tpu_custom_call.1} parent=1 // pred_fallthru
      _
    // Predicated region
    $region46: #{tpu_custom_call.1} parent=1 // pred_check
      _
    $region47: #{tpu_custom_call.1} parent=1 // pred_check_branch
      %100 = sbr.rel (0) target = $region49
    $region48: #{tpu_custom_call.1} parent=1 // pred_region
      %101 = dma.done [#allocation6], 64
    $region49: #{tpu_custom_call.1} parent=1 // pred_fallthru
      _
    // Predicated region
    $region50: #{tpu_custom_call.1} parent=1 // pred_check
      _
    $region51: #{tpu_custom_call.1} parent=1 // pred_check_branch
      %103 = sbr.rel (0) target = $region53
    $region52: #{tpu_custom_call.1} parent=1 // pred_region
      %104 = dma.done [#allocation9], 8192
    $region53: #{tpu_custom_call.1} parent=1 // pred_fallthru
      _
    // Predicated region
    $region54: #{tpu_custom_call.1} parent=1 // pred_check
      _
    $region55: #{tpu_custom_call.1} parent=1 // pred_check_branch
      %106 = sbr.rel (0) target = $region57
    $region56: #{tpu_custom_call.1} parent=1 // pred_region
      %107 = dma.done [#allocation9], 2048
    $region57: #{tpu_custom_call.1} parent=1 // pred_fallthru
      _
    // Predicated region
    $region58: #{tpu_custom_call.1} parent=1 // pred_check
      _
    $region59: #{tpu_custom_call.1} parent=1 // pred_check_branch
      %109 = sbr.rel (0) target = $region61
    $region60: #{tpu_custom_call.1} parent=1 // pred_region
      %110 = dma.done [#allocation12], 1024
    $region61: #{tpu_custom_call.1} parent=1 // pred_fallthru
      _
    %v112 = vld [vmem:[#allocation2] sm:$0xf]
    %v113 = vld [vmem:[#allocation5] sm:$0xff]
    %v114 = vld [vmem:[#allocation5 + $0x8] sm:$0xff]
    %v115 = vld [vmem:[#allocation5 + $0x10] sm:$0xff]
    %v116 = vld [vmem:[#allocation5 + $0x18] sm:$0xff]
    %v117 = vld [vmem:[#allocation5 + $0x20] sm:$0xff]
    %v118 = vld [vmem:[#allocation5 + $0x28] sm:$0xff]
    %v119 = vld [vmem:[#allocation5 + $0x30] sm:$0xff]
    %v120 = vld [vmem:[#allocation5 + $0x38] sm:$0xff]
    %v121 = vld [vmem:[#allocation7] sm:$0xf]
    %v123 = vlaneseq
    %v124 = vshrl.u32 %v123, 7
    %v125 = vsub.s32 0, %v124
    %v126 = vrot.slane %v121, %v125
    %v127 = vlaneseq
    %v128 = vshrl.u32 %v127, 7
    %v129 = vsub.s32 1, %v128
    %v130 = vrot.slane %v121, %v129
    %v131 = vlaneseq
    %v132 = vshrl.u32 %v131, 7
    %v133 = vsub.s32 2, %v132
    %v134 = vrot.slane %v121, %v133
    %v135 = vlaneseq
    %v136 = vshrl.u32 %v135, 7
    %v137 = vsub.s32 3, %v136
    %v138 = vrot.slane %v121, %v137
    %v151 = vunpack.c.l.b16 %v113
    %v152 = vunpack.c.h.b16 %v113
    %v153 = vunpack.c.l.b16 %v114
    %v154 = vunpack.c.h.b16 %v114
    %v155 = vunpack.c.l.b16 %v115
    %v156 = vunpack.c.h.b16 %v115
    %v157 = vunpack.c.l.b16 %v116
    %v158 = vunpack.c.h.b16 %v116
    %v159 = vunpack.c.l.b16 %v117
    %v160 = vunpack.c.h.b16 %v117
    %v161 = vunpack.c.l.b16 %v118
    %v162 = vunpack.c.h.b16 %v118
    %v163 = vunpack.c.l.b16 %v119
    %v164 = vunpack.c.h.b16 %v119
    %v165 = vunpack.c.l.b16 %v120
    %v166 = vunpack.c.h.b16 %v120
    %v167 = vpack.c.b16 %v155, %v151
    %v168 = vpack.c.b16 %v156, %v152
    %v169 = vpack.c.b16 %v157, %v153
    %v170 = vpack.c.b16 %v158, %v154
    %v171 = vpack.c.b16 %v163, %v159
    %v172 = vpack.c.b16 %v164, %v160
    %v173 = vpack.c.b16 %v165, %v161
    %v174 = vpack.c.b16 %v166, %v162
    %vm183 = vcmask 261120
    %v185 = vsel %vm183, %v112, 0
    %187 = vmatprep.subr.bf16.mxu0 0
    %188 = vmatpush1.bf16.msra.mxu0 0
    %189 = vmatprep.subr.bf16.mxu0 0
    %190 = vmatpush1.bf16.msra.mxu0 0
    %191 = vmatprep.subr.bf16.mxu0 0
    %192 = vmatpush1.bf16.msra.mxu0 0
    %193 = vmatprep.subr.bf16.mxu0 0
    %194 = vmatpush1.bf16.msra.mxu0 0
    %195 = vmatprep.subr.bf16.mxu0 0
    %196 = vmatpush1.bf16.msra.mxu0 0
    %197 = vmatprep.subr.bf16.mxu0 0
    %198 = vmatpush1.bf16.msra.mxu0 0
    %199 = vmatprep.subr.bf16.mxu0 %v172
    %200 = vmatpush1.bf16.msra.mxu0 %v171
    %201 = vmatprep.subr.bf16.mxu0 %v168
    %202 = vmatpush1.bf16.msra.mxu0 %v167
    %203 = vmatprep.subr.bf16.mxu0 0
    %204 = vmatpush2.bf16.msra.mxu0 0
    %205 = vmatprep.subr.bf16.mxu0 0
    %206 = vmatpush2.bf16.msra.mxu0 0
    %207 = vmatprep.subr.bf16.mxu0 0
    %208 = vmatpush2.bf16.msra.mxu0 0
    %209 = vmatprep.subr.bf16.mxu0 0
    %210 = vmatpush2.bf16.msra.mxu0 0
    %211 = vmatprep.subr.bf16.mxu0 0
    %212 = vmatpush2.bf16.msra.mxu0 0
    %213 = vmatprep.subr.bf16.mxu0 0
    %214 = vmatpush2.bf16.msra.mxu0 0
    %215 = vmatprep.subr.bf16.mxu0 0
    %216 = vmatpush2.bf16.msra.mxu0 0
    %217 = vmatprep.subr.bf16.mxu0 0
    %218 = vmatpush2.bf16.msra.mxu0 0
    %219 = vmatprep.mubr.bf16.mxu0 0
    %220 = vmatmul.mubr.bf16.gmra.mxu0 %v185
    %v221 = vpop.f32.mrf.mxu0
    %v222 = vadd.f32 %v126, %v221
    %v223 = vpop.f32.mrf.mxu0
    %v224 = vadd.f32 %v130, %v223
    %v225 = vpop.f32.mrf.mxu0
    %v226 = vpop.f32.mrf.mxu0
    %227 = vdwg.mxu0
    %228 = vmatprep.subr.bf16.mxu0 0
    %229 = vmatpush1.bf16.msra.mxu0 0
    %230 = vmatprep.subr.bf16.mxu0 0
    %231 = vmatpush1.bf16.msra.mxu0 0
    %232 = vmatprep.subr.bf16.mxu0 0
    %233 = vmatpush1.bf16.msra.mxu0 0
    %234 = vmatprep.subr.bf16.mxu0 0
    %235 = vmatpush1.bf16.msra.mxu0 0
    %236 = vmatprep.subr.bf16.mxu0 0
    %237 = vmatpush1.bf16.msra.mxu0 0
    %238 = vmatprep.subr.bf16.mxu0 0
    %239 = vmatpush1.bf16.msra.mxu0 0
    %240 = vmatprep.subr.bf16.mxu0 %v174
    %241 = vmatpush1.bf16.msra.mxu0 %v173
    %242 = vmatprep.subr.bf16.mxu0 %v170
    %243 = vmatpush1.bf16.msra.mxu0 %v169
    %244 = vmatprep.subr.bf16.mxu0 0
    %245 = vmatpush2.bf16.msra.mxu0 0
    %246 = vmatprep.subr.bf16.mxu0 0
    %247 = vmatpush2.bf16.msra.mxu0 0
    %248 = vmatprep.subr.bf16.mxu0 0
    %249 = vmatpush2.bf16.msra.mxu0 0
    %250 = vmatprep.subr.bf16.mxu0 0
    %251 = vmatpush2.bf16.msra.mxu0 0
    %252 = vmatprep.subr.bf16.mxu0 0
    %253 = vmatpush2.bf16.msra.mxu0 0
    %254 = vmatprep.subr.bf16.mxu0 0
    %255 = vmatpush2.bf16.msra.mxu0 0
    %256 = vmatprep.subr.bf16.mxu0 0
    %257 = vmatpush2.bf16.msra.mxu0 0
    %258 = vmatprep.subr.bf16.mxu0 0
    %259 = vmatpush2.bf16.msra.mxu0 0
    %260 = vmatprep.mubr.bf16.mxu0 0
    %261 = vmatmul.mubr.bf16.gmra.mxu0 %v185
    %v262 = vpop.f32.mrf.mxu0
    %v263 = vadd.f32 %v134, %v262
    %v264 = vpop.f32.mrf.mxu0
    %v265 = vadd.f32 %v138, %v264
    %v266 = vpop.f32.mrf.mxu0
    %v267 = vpop.f32.mrf.mxu0
    %268 = vdwg.mxu0
    %v269 = vmax.f32 %v222, 0.0
    %v270 = vmax.f32 %v224, 0.0
    %v271 = vmax.f32 %v263, 0.0
    %v272 = vmax.f32 %v265, 0.0
    %v273 = vpack.c.bf16 %v269, %v269
    %v274 = vpack.c.bf16 %v270, %v270
    %v275 = vpack.c.bf16 %v271, %v271
    %v276 = vpack.c.bf16 %v272, %v272
    %v277 = vld [vmem:[#allocation8] sm:$0xff]
    %v278 = vld [vmem:[#allocation8 + $0x8] sm:$0xff]
    %v279 = vld [vmem:[#allocation8 + $0x10] sm:$0xff]
    %v280 = vld [vmem:[#allocation8 + $0x18] sm:$0xff]
    %v281 = vld [vmem:[#allocation8 + $0x20] sm:$0xff]
    %v282 = vld [vmem:[#allocation8 + $0x28] sm:$0xff]
    %v283 = vld [vmem:[#allocation8 + $0x30] sm:$0xff]
    %v284 = vld [vmem:[#allocation8 + $0x38] sm:$0xff]
    %v285 = vld [vmem:[#allocation8 + $0x40] sm:$0xff]
    %v286 = vld [vmem:[#allocation8 + $0x48] sm:$0xff]
    %v287 = vld [vmem:[#allocation8 + $0x50] sm:$0xff]
    %v288 = vld [vmem:[#allocation8 + $0x58] sm:$0xff]
    %v289 = vld [vmem:[#allocation8 + $0x60] sm:$0xff]
    %v290 = vld [vmem:[#allocation8 + $0x68] sm:$0xff]
    %v291 = vld [vmem:[#allocation8 + $0x70] sm:$0xff]
    %v292 = vld [vmem:[#allocation8 + $0x78] sm:$0xff]
    %v293 = vld [vmem:[#allocation8 + $0x80] sm:$0xff]
    %v294 = vld [vmem:[#allocation8 + $0x88] sm:$0xff]
    %v295 = vld [vmem:[#allocation8 + $0x90] sm:$0xff]
    %v296 = vld [vmem:[#allocation8 + $0x98] sm:$0xff]
    %v297 = vld [vmem:[#allocation8 + $0xa0] sm:$0xff]
    %v298 = vld [vmem:[#allocation8 + $0xa8] sm:$0xff]
    %v299 = vld [vmem:[#allocation8 + $0xb0] sm:$0xff]
    %v300 = vld [vmem:[#allocation8 + $0xb8] sm:$0xff]
    %v301 = vld [vmem:[#allocation8 + $0xc0] sm:$0xff]
    %v302 = vld [vmem:[#allocation8 + $0xc8] sm:$0xff]
    %v303 = vld [vmem:[#allocation8 + $0xd0] sm:$0xff]
    %v304 = vld [vmem:[#allocation8 + $0xd8] sm:$0xff]
    %v305 = vld [vmem:[#allocation8 + $0xe0] sm:$0xff]
    %v306 = vld [vmem:[#allocation8 + $0xe8] sm:$0xff]
    %v307 = vld [vmem:[#allocation8 + $0xf0] sm:$0xff]
    %v308 = vld [vmem:[#allocation8 + $0xf8] sm:$0xff]
    %v309 = vld [vmem:[#allocation8 + $0x100] sm:$0xff]
    %v310 = vld [vmem:[#allocation8 + $0x108] sm:$0xff]
    %v311 = vld [vmem:[#allocation8 + $0x110] sm:$0xff]
    %v312 = vld [vmem:[#allocation8 + $0x118] sm:$0xff]
    %v313 = vld [vmem:[#allocation8 + $0x120] sm:$0xff]
    %v314 = vld [vmem:[#allocation8 + $0x128] sm:$0xff]
    %v315 = vld [vmem:[#allocation8 + $0x130] sm:$0xff]
    %v316 = vld [vmem:[#allocation8 + $0x138] sm:$0xff]
    %v317 = vld [vmem:[#allocation8 + $0x140] sm:$0xff]
    %v318 = vld [vmem:[#allocation8 + $0x148] sm:$0xff]
    %v319 = vld [vmem:[#allocation8 + $0x150] sm:$0xff]
    %v320 = vld [vmem:[#allocation8 + $0x158] sm:$0xff]
    %v321 = vld [vmem:[#allocation8 + $0x160] sm:$0xff]
    %v322 = vld [vmem:[#allocation8 + $0x168] sm:$0xff]
    %v323 = vld [vmem:[#allocation8 + $0x170] sm:$0xff]
    %v324 = vld [vmem:[#allocation8 + $0x178] sm:$0xff]
    %v325 = vld [vmem:[#allocation8 + $0x180] sm:$0xff]
    %v326 = vld [vmem:[#allocation8 + $0x188] sm:$0xff]
    %v327 = vld [vmem:[#allocation8 + $0x190] sm:$0xff]
    %v328 = vld [vmem:[#allocation8 + $0x198] sm:$0xff]
    %v329 = vld [vmem:[#allocation8 + $0x1a0] sm:$0xff]
    %v330 = vld [vmem:[#allocation8 + $0x1a8] sm:$0xff]
    %v331 = vld [vmem:[#allocation8 + $0x1b0] sm:$0xff]
    %v332 = vld [vmem:[#allocation8 + $0x1b8] sm:$0xff]
    %v333 = vld [vmem:[#allocation8 + $0x1c0] sm:$0xff]
    %v334 = vld [vmem:[#allocation8 + $0x1c8] sm:$0xff]
    %v335 = vld [vmem:[#allocation8 + $0x1d0] sm:$0xff]
    %v336 = vld [vmem:[#allocation8 + $0x1d8] sm:$0xff]
    %v337 = vld [vmem:[#allocation8 + $0x1e0] sm:$0xff]
    %v338 = vld [vmem:[#allocation8 + $0x1e8] sm:$0xff]
    %v339 = vld [vmem:[#allocation8 + $0x1f0] sm:$0xff]
    %v340 = vld [vmem:[#allocation8 + $0x1f8] sm:$0xff]
    %v341 = vld [vmem:[%s4] sm:$0x3]
    %v343 = vlaneseq
    %v344 = vshrl.u32 %v343, 7
    %v345 = vsub.s32 0, %v344
    %v346 = vrot.slane %v341, %v345
    %v347 = vlaneseq
    %v348 = vshrl.u32 %v347, 7
    %v349 = vsub.s32 1, %v348
    %v350 = vrot.slane %v341, %v349
    %v417 = vunpack.c.l.b16 %v277
    %v418 = vunpack.c.h.b16 %v277
    %v419 = vunpack.c.l.b16 %v278
    %v420 = vunpack.c.h.b16 %v278
    %v421 = vunpack.c.l.b16 %v279
    %v422 = vunpack.c.h.b16 %v279
    %v423 = vunpack.c.l.b16 %v280
    %v424 = vunpack.c.h.b16 %v280
    %v425 = vunpack.c.l.b16 %v281
    %v426 = vunpack.c.h.b16 %v281
    %v427 = vunpack.c.l.b16 %v282
    %v428 = vunpack.c.h.b16 %v282
    %v429 = vunpack.c.l.b16 %v283
    %v430 = vunpack.c.h.b16 %v283
    %v431 = vunpack.c.l.b16 %v284
    %v432 = vunpack.c.h.b16 %v284
    %v433 = vunpack.c.l.b16 %v285
    %v434 = vunpack.c.h.b16 %v285
    %v435 = vunpack.c.l.b16 %v286
    %v436 = vunpack.c.h.b16 %v286
    %v437 = vunpack.c.l.b16 %v287
    %v438 = vunpack.c.h.b16 %v287
    %v439 = vunpack.c.l.b16 %v288
    %v440 = vunpack.c.h.b16 %v288
    %v441 = vunpack.c.l.b16 %v289
    %v442 = vunpack.c.h.b16 %v289
    %v443 = vunpack.c.l.b16 %v290
    %v444 = vunpack.c.h.b16 %v290
    %v445 = vunpack.c.l.b16 %v291
    %v446 = vunpack.c.h.b16 %v291
    %v447 = vunpack.c.l.b16 %v292
    %v448 = vunpack.c.h.b16 %v292
    %v449 = vunpack.c.l.b16 %v293
    %v450 = vunpack.c.h.b16 %v293
    %v451 = vunpack.c.l.b16 %v294
    %v452 = vunpack.c.h.b16 %v294
    %v453 = vunpack.c.l.b16 %v295
    %v454 = vunpack.c.h.b16 %v295
    %v455 = vunpack.c.l.b16 %v296
    %v456 = vunpack.c.h.b16 %v296
    %v457 = vunpack.c.l.b16 %v297
    %v458 = vunpack.c.h.b16 %v297
    %v459 = vunpack.c.l.b16 %v298
    %v460 = vunpack.c.h.b16 %v298
    %v461 = vunpack.c.l.b16 %v299
    %v462 = vunpack.c.h.b16 %v299
    %v463 = vunpack.c.l.b16 %v300
    %v464 = vunpack.c.h.b16 %v300
    %v465 = vunpack.c.l.b16 %v301
    %v466 = vunpack.c.h.b16 %v301
    %v467 = vunpack.c.l.b16 %v302
    %v468 = vunpack.c.h.b16 %v302
    %v469 = vunpack.c.l.b16 %v303
    %v470 = vunpack.c.h.b16 %v303
    %v471 = vunpack.c.l.b16 %v304
    %v472 = vunpack.c.h.b16 %v304
    %v473 = vunpack.c.l.b16 %v305
    %v474 = vunpack.c.h.b16 %v305
    %v475 = vunpack.c.l.b16 %v306
    %v476 = vunpack.c.h.b16 %v306
    %v477 = vunpack.c.l.b16 %v307
    %v478 = vunpack.c.h.b16 %v307
    %v479 = vunpack.c.l.b16 %v308
    %v480 = vunpack.c.h.b16 %v308
    %v481 = vunpack.c.l.b16 %v309
    %v482 = vunpack.c.h.b16 %v309
    %v483 = vunpack.c.l.b16 %v310
    %v484 = vunpack.c.h.b16 %v310
    %v485 = vunpack.c.l.b16 %v311
    %v486 = vunpack.c.h.b16 %v311
    %v487 = vunpack.c.l.b16 %v312
    %v488 = vunpack.c.h.b16 %v312
    %v489 = vunpack.c.l.b16 %v313
    %v490 = vunpack.c.h.b16 %v313
    %v491 = vunpack.c.l.b16 %v314
    %v492 = vunpack.c.h.b16 %v314
    %v493 = vunpack.c.l.b16 %v315
    %v494 = vunpack.c.h.b16 %v315
    %v495 = vunpack.c.l.b16 %v316
    %v496 = vunpack.c.h.b16 %v316
    %v497 = vunpack.c.l.b16 %v317
    %v498 = vunpack.c.h.b16 %v317
    %v499 = vunpack.c.l.b16 %v318
    %v500 = vunpack.c.h.b16 %v318
    %v501 = vunpack.c.l.b16 %v319
    %v502 = vunpack.c.h.b16 %v319
    %v503 = vunpack.c.l.b16 %v320
    %v504 = vunpack.c.h.b16 %v320
    %v505 = vunpack.c.l.b16 %v321
    %v506 = vunpack.c.h.b16 %v321
    %v507 = vunpack.c.l.b16 %v322
    %v508 = vunpack.c.h.b16 %v322
    %v509 = vunpack.c.l.b16 %v323
    %v510 = vunpack.c.h.b16 %v323
    %v511 = vunpack.c.l.b16 %v324
    %v512 = vunpack.c.h.b16 %v324
    %v513 = vunpack.c.l.b16 %v325
    %v514 = vunpack.c.h.b16 %v325
    %v515 = vunpack.c.l.b16 %v326
    %v516 = vunpack.c.h.b16 %v326
    %v517 = vunpack.c.l.b16 %v327
    %v518 = vunpack.c.h.b16 %v327
    %v519 = vunpack.c.l.b16 %v328
    %v520 = vunpack.c.h.b16 %v328
    %v521 = vunpack.c.l.b16 %v329
    %v522 = vunpack.c.h.b16 %v329
    %v523 = vunpack.c.l.b16 %v330
    %v524 = vunpack.c.h.b16 %v330
    %v525 = vunpack.c.l.b16 %v331
    %v526 = vunpack.c.h.b16 %v331
    %v527 = vunpack.c.l.b16 %v332
    %v528 = vunpack.c.h.b16 %v332
    %v529 = vunpack.c.l.b16 %v333
    %v530 = vunpack.c.h.b16 %v333
    %v531 = vunpack.c.l.b16 %v334
    %v532 = vunpack.c.h.b16 %v334
    %v533 = vunpack.c.l.b16 %v335
    %v534 = vunpack.c.h.b16 %v335
    %v535 = vunpack.c.l.b16 %v336
    %v536 = vunpack.c.h.b16 %v336
    %v537 = vunpack.c.l.b16 %v337
    %v538 = vunpack.c.h.b16 %v337
    %v539 = vunpack.c.l.b16 %v338
    %v540 = vunpack.c.h.b16 %v338
    %v541 = vunpack.c.l.b16 %v339
    %v542 = vunpack.c.h.b16 %v339
    %v543 = vunpack.c.l.b16 %v340
    %v544 = vunpack.c.h.b16 %v340
    %v545 = vpack.c.b16 %v419, %v417
    %v546 = vpack.c.b16 %v420, %v418
    %v547 = vpack.c.b16 %v423, %v421
    %v548 = vpack.c.b16 %v424, %v422
    %v549 = vpack.c.b16 %v427, %v425
    %v550 = vpack.c.b16 %v428, %v426
    %v551 = vpack.c.b16 %v431, %v429
    %v552 = vpack.c.b16 %v432, %v430
    %v553 = vpack.c.b16 %v435, %v433
    %v554 = vpack.c.b16 %v436, %v434
    %v555 = vpack.c.b16 %v439, %v437
    %v556 = vpack.c.b16 %v440, %v438
    %v557 = vpack.c.b16 %v443, %v441
    %v558 = vpack.c.b16 %v444, %v442
    %v559 = vpack.c.b16 %v447, %v445
    %v560 = vpack.c.b16 %v448, %v446
    %v561 = vpack.c.b16 %v451, %v449
    %v562 = vpack.c.b16 %v452, %v450
    %v563 = vpack.c.b16 %v455, %v453
    %v564 = vpack.c.b16 %v456, %v454
    %v565 = vpack.c.b16 %v459, %v457
    %v566 = vpack.c.b16 %v460, %v458
    %v567 = vpack.c.b16 %v463, %v461
    %v568 = vpack.c.b16 %v464, %v462
    %v569 = vpack.c.b16 %v467, %v465
    %v570 = vpack.c.b16 %v468, %v466
    %v571 = vpack.c.b16 %v471, %v469
    %v572 = vpack.c.b16 %v472, %v470
    %v573 = vpack.c.b16 %v475, %v473
    %v574 = vpack.c.b16 %v476, %v474
    %v575 = vpack.c.b16 %v479, %v477
    %v576 = vpack.c.b16 %v480, %v478
    %v577 = vpack.c.b16 %v483, %v481
    %v578 = vpack.c.b16 %v484, %v482
    %v579 = vpack.c.b16 %v487, %v485
    %v580 = vpack.c.b16 %v488, %v486
    %v581 = vpack.c.b16 %v491, %v489
    %v582 = vpack.c.b16 %v492, %v490
    %v583 = vpack.c.b16 %v495, %v493
    %v584 = vpack.c.b16 %v496, %v494
    %v585 = vpack.c.b16 %v499, %v497
    %v586 = vpack.c.b16 %v500, %v498
    %v587 = vpack.c.b16 %v503, %v501
    %v588 = vpack.c.b16 %v504, %v502
    %v589 = vpack.c.b16 %v507, %v505
    %v590 = vpack.c.b16 %v508, %v506
    %v591 = vpack.c.b16 %v511, %v509
    %v592 = vpack.c.b16 %v512, %v510
    %v593 = vpack.c.b16 %v515, %v513
    %v594 = vpack.c.b16 %v516, %v514
    %v595 = vpack.c.b16 %v519, %v517
    %v596 = vpack.c.b16 %v520, %v518
    %v597 = vpack.c.b16 %v523, %v521
    %v598 = vpack.c.b16 %v524, %v522
    %v599 = vpack.c.b16 %v527, %v525
    %v600 = vpack.c.b16 %v528, %v526
    %v601 = vpack.c.b16 %v531, %v529
    %v602 = vpack.c.b16 %v532, %v530
    %v603 = vpack.c.b16 %v535, %v533
    %v604 = vpack.c.b16 %v536, %v534
    %v605 = vpack.c.b16 %v539, %v537
    %v606 = vpack.c.b16 %v540, %v538
    %v607 = vpack.c.b16 %v543, %v541
    %v608 = vpack.c.b16 %v544, %v542
    %673 = vmatprep.subr.bf16.mxu0 %v560
    %674 = vmatpush1.bf16.msra.mxu0 %v559
    %675 = vmatprep.subr.bf16.mxu0 %v558
    %676 = vmatpush1.bf16.msra.mxu0 %v557
    %677 = vmatprep.subr.bf16.mxu0 %v556
    %678 = vmatpush1.bf16.msra.mxu0 %v555
    %679 = vmatprep.subr.bf16.mxu0 %v554
    %680 = vmatpush1.bf16.msra.mxu0 %v553
    %681 = vmatprep.subr.bf16.mxu0 %v552
    %682 = vmatpush1.bf16.msra.mxu0 %v551
    %683 = vmatprep.subr.bf16.mxu0 %v550
    %684 = vmatpush1.bf16.msra.mxu0 %v549
    %685 = vmatprep.subr.bf16.mxu0 %v548
    %686 = vmatpush1.bf16.msra.mxu0 %v547
    %687 = vmatprep.subr.bf16.mxu0 %v546
    %688 = vmatpush1.bf16.msra.mxu0 %v545
    %689 = vmatprep.subr.bf16.mxu0 %v576
    %690 = vmatpush2.bf16.msra.mxu0 %v575
    %691 = vmatprep.subr.bf16.mxu0 %v574
    %692 = vmatpush2.bf16.msra.mxu0 %v573
    %693 = vmatprep.subr.bf16.mxu0 %v572
    %694 = vmatpush2.bf16.msra.mxu0 %v571
    %695 = vmatprep.subr.bf16.mxu0 %v570
    %696 = vmatpush2.bf16.msra.mxu0 %v569
    %697 = vmatprep.subr.bf16.mxu0 %v568
    %698 = vmatpush2.bf16.msra.mxu0 %v567
    %699 = vmatprep.subr.bf16.mxu0 %v566
    %700 = vmatpush2.bf16.msra.mxu0 %v565
    %701 = vmatprep.subr.bf16.mxu0 %v564
    %702 = vmatpush2.bf16.msra.mxu0 %v563
    %703 = vmatprep.subr.bf16.mxu0 %v562
    %704 = vmatpush2.bf16.msra.mxu0 %v561
    %705 = vmatprep.mubr.bf16.mxu0 %v274
    %706 = vmatmul.mubr.bf16.gmra.mxu0 %v273
    %v707 = vpop.f32.mrf.mxu0
    %v708 = vadd.f32 %v346, %v707
    %v709 = vpop.f32.mrf.mxu0
    %v710 = vadd.f32 %v350, %v709
    %v711 = vpop.f32.mrf.mxu0
    %v712 = vpop.f32.mrf.mxu0
    %713 = vdwg.mxu0
    %714 = vmatprep.subr.bf16.mxu0 %v592
    %715 = vmatpush1.bf16.msra.mxu0 %v591
    %716 = vmatprep.subr.bf16.mxu0 %v590
    %717 = vmatpush1.bf16.msra.mxu0 %v589
    %718 = vmatprep.subr.bf16.mxu0 %v588
    %719 = vmatpush1.bf16.msra.mxu0 %v587
    %720 = vmatprep.subr.bf16.mxu0 %v586
    %721 = vmatpush1.bf16.msra.mxu0 %v585
    %722 = vmatprep.subr.bf16.mxu0 %v584
    %723 = vmatpush1.bf16.msra.mxu0 %v583
    %724 = vmatprep.subr.bf16.mxu0 %v582
    %725 = vmatpush1.bf16.msra.mxu0 %v581
    %726 = vmatprep.subr.bf16.mxu0 %v580
    %727 = vmatpush1.bf16.msra.mxu0 %v579
    %728 = vmatprep.subr.bf16.mxu0 %v578
    %729 = vmatpush1.bf16.msra.mxu0 %v577
    %730 = vmatprep.subr.bf16.mxu0 %v608
    %731 = vmatpush2.bf16.msra.mxu0 %v607
    %732 = vmatprep.subr.bf16.mxu0 %v606
    %733 = vmatpush2.bf16.msra.mxu0 %v605
    %734 = vmatprep.subr.bf16.mxu0 %v604
    %735 = vmatpush2.bf16.msra.mxu0 %v603
    %736 = vmatprep.subr.bf16.mxu0 %v602
    %737 = vmatpush2.bf16.msra.mxu0 %v601
    %738 = vmatprep.subr.bf16.mxu0 %v600
    %739 = vmatpush2.bf16.msra.mxu0 %v599
    %740 = vmatprep.subr.bf16.mxu0 %v598
    %741 = vmatpush2.bf16.msra.mxu0 %v597
    %742 = vmatprep.subr.bf16.mxu0 %v596
    %743 = vmatpush2.bf16.msra.mxu0 %v595
    %744 = vmatprep.subr.bf16.mxu0 %v594
    %745 = vmatpush2.bf16.msra.mxu0 %v593
    %746 = vmatprep.mubr.bf16.mxu0 %v276
    %747 = vmatmul.mubr.bf16.gmra.mxu0 %v275
    %v748 = vpop.f32.mrf.mxu0
    %v749 = vadd.f32 %v708, %v748
    %v750 = vpop.f32.mrf.mxu0
    %v751 = vadd.f32 %v710, %v750
    %v752 = vpop.f32.mrf.mxu0
    %v753 = vpop.f32.mrf.mxu0
    %754 = vdwg.mxu0
    %v755 = vmax.f32 %v749, 0.0
    %v756 = vmax.f32 %v751, 0.0
    %v757 = vpack.c.bf16 %v755, %v755
    %v758 = vpack.c.bf16 %v756, %v756
    %v759 = vld [vmem:[#allocation10] sm:$0xf]
    %v760 = vld [vmem:[#allocation10 + $0x4] sm:$0xf]
    %v761 = vld [vmem:[#allocation10 + $0x8] sm:$0xf]
    %v762 = vld [vmem:[#allocation10 + $0xc] sm:$0xf]
    %v763 = vld [vmem:[#allocation10 + $0x10] sm:$0xf]
    %v764 = vld [vmem:[#allocation10 + $0x14] sm:$0xf]
    %v765 = vld [vmem:[#allocation10 + $0x18] sm:$0xf]
    %v766 = vld [vmem:[#allocation10 + $0x1c] sm:$0xf]
    %v767 = vld [vmem:[#allocation10 + $0x20] sm:$0xf]
    %v768 = vld [vmem:[#allocation10 + $0x24] sm:$0xf]
    %v769 = vld [vmem:[#allocation10 + $0x28] sm:$0xf]
    %v770 = vld [vmem:[#allocation10 + $0x2c] sm:$0xf]
    %v771 = vld [vmem:[#allocation10 + $0x30] sm:$0xf]
    %v772 = vld [vmem:[#allocation10 + $0x34] sm:$0xf]
    %v773 = vld [vmem:[#allocation10 + $0x38] sm:$0xf]
    %v774 = vld [vmem:[#allocation10 + $0x3c] sm:$0xf]
    %v775 = vld [vmem:[#allocation10 + $0x40] sm:$0xf]
    %v776 = vld [vmem:[#allocation10 + $0x44] sm:$0xf]
    %v777 = vld [vmem:[#allocation10 + $0x48] sm:$0xf]
    %v778 = vld [vmem:[#allocation10 + $0x4c] sm:$0xf]
    %v779 = vld [vmem:[#allocation10 + $0x50] sm:$0xf]
    %v780 = vld [vmem:[#allocation10 + $0x54] sm:$0xf]
    %v781 = vld [vmem:[#allocation10 + $0x58] sm:$0xf]
    %v782 = vld [vmem:[#allocation10 + $0x5c] sm:$0xf]
    %v783 = vld [vmem:[#allocation10 + $0x60] sm:$0xf]
    %v784 = vld [vmem:[#allocation10 + $0x64] sm:$0xf]
    %v785 = vld [vmem:[#allocation10 + $0x68] sm:$0xf]
    %v786 = vld [vmem:[#allocation10 + $0x6c] sm:$0xf]
    %v787 = vld [vmem:[#allocation10 + $0x70] sm:$0xf]
    %v788 = vld [vmem:[#allocation10 + $0x74] sm:$0xf]
    %v789 = vld [vmem:[#allocation10 + $0x78] sm:$0xf]
    %v790 = vld [vmem:[#allocation10 + $0x7c] sm:$0xf]
    %v791 = vld [vmem:[%s6] sm:$0x1]
    %v793 = vlaneseq
    %v794 = vshrl.u32 %v793, 7
    %v795 = vsub.s32 0, %v794
    %v796 = vrot.slane %v791, %v795
    %v830 = vunpack.c.l.b16 %v759
    %v831 = vunpack.c.l.b16 %v760
    %v832 = vunpack.c.l.b16 %v761
    %v833 = vunpack.c.l.b16 %v762
    %v834 = vunpack.c.l.b16 %v763
    %v835 = vunpack.c.l.b16 %v764
    %v836 = vunpack.c.l.b16 %v765
    %v837 = vunpack.c.l.b16 %v766
    %v838 = vunpack.c.l.b16 %v767
    %v839 = vunpack.c.l.b16 %v768
    %v840 = vunpack.c.l.b16 %v769
    %v841 = vunpack.c.l.b16 %v770
    %v842 = vunpack.c.l.b16 %v771
    %v843 = vunpack.c.l.b16 %v772
    %v844 = vunpack.c.l.b16 %v773
    %v845 = vunpack.c.l.b16 %v774
    %v846 = vunpack.c.l.b16 %v775
    %v847 = vunpack.c.l.b16 %v776
    %v848 = vunpack.c.l.b16 %v777
    %v849 = vunpack.c.l.b16 %v778
    %v850 = vunpack.c.l.b16 %v779
    %v851 = vunpack.c.l.b16 %v780
    %v852 = vunpack.c.l.b16 %v781
    %v853 = vunpack.c.l.b16 %v782
    %v854 = vunpack.c.l.b16 %v783
    %v855 = vunpack.c.l.b16 %v784
    %v856 = vunpack.c.l.b16 %v785
    %v857 = vunpack.c.l.b16 %v786
    %v858 = vunpack.c.l.b16 %v787
    %v859 = vunpack.c.l.b16 %v788
    %v860 = vunpack.c.l.b16 %v789
    %v861 = vunpack.c.l.b16 %v790
    %v862 = vpack.c.b16 %v831, %v830
    %v863 = vpack.c.b16 %v833, %v832
    %v864 = vpack.c.b16 %v835, %v834
    %v865 = vpack.c.b16 %v837, %v836
    %v866 = vpack.c.b16 %v839, %v838
    %v867 = vpack.c.b16 %v841, %v840
    %v868 = vpack.c.b16 %v843, %v842
    %v869 = vpack.c.b16 %v845, %v844
    %v870 = vpack.c.b16 %v847, %v846
    %v871 = vpack.c.b16 %v849, %v848
    %v872 = vpack.c.b16 %v851, %v850
    %v873 = vpack.c.b16 %v853, %v852
    %v874 = vpack.c.b16 %v855, %v854
    %v875 = vpack.c.b16 %v857, %v856
    %v876 = vpack.c.b16 %v859, %v858
    %v877 = vpack.c.b16 %v861, %v860
    %894 = vmatprep.subr.bf16.mxu0 0
    %895 = vmatpush1.bf16.msra.mxu0 %v869
    %896 = vmatprep.subr.bf16.mxu0 0
    %897 = vmatpush1.bf16.msra.mxu0 %v868
    %898 = vmatprep.subr.bf16.mxu0 0
    %899 = vmatpush1.bf16.msra.mxu0 %v867
    %900 = vmatprep.subr.bf16.mxu0 0
    %901 = vmatpush1.bf16.msra.mxu0 %v866
    %902 = vmatprep.subr.bf16.mxu0 0
    %903 = vmatpush1.bf16.msra.mxu0 %v865
    %904 = vmatprep.subr.bf16.mxu0 0
    %905 = vmatpush1.bf16.msra.mxu0 %v864
    %906 = vmatprep.subr.bf16.mxu0 0
    %907 = vmatpush1.bf16.msra.mxu0 %v863
    %908 = vmatprep.subr.bf16.mxu0 0
    %909 = vmatpush1.bf16.msra.mxu0 %v862
    %910 = vmatprep.subr.bf16.mxu0 0
    %911 = vmatpush2.bf16.msra.mxu0 %v877
    %912 = vmatprep.subr.bf16.mxu0 0
    %913 = vmatpush2.bf16.msra.mxu0 %v876
    %914 = vmatprep.subr.bf16.mxu0 0
    %915 = vmatpush2.bf16.msra.mxu0 %v875
    %916 = vmatprep.subr.bf16.mxu0 0
    %917 = vmatpush2.bf16.msra.mxu0 %v874
    %918 = vmatprep.subr.bf16.mxu0 0
    %919 = vmatpush2.bf16.msra.mxu0 %v873
    %920 = vmatprep.subr.bf16.mxu0 0
    %921 = vmatpush2.bf16.msra.mxu0 %v872
    %922 = vmatprep.subr.bf16.mxu0 0
    %923 = vmatpush2.bf16.msra.mxu0 %v871
    %924 = vmatprep.subr.bf16.mxu0 0
    %925 = vmatpush2.bf16.msra.mxu0 %v870
    %926 = vmatprep.mubr.bf16.mxu0 %v758
    %927 = vmatmul.mubr.bf16.gmra.mxu0 %v757
    %v928 = vpop.f32.mrf.mxu0
    %v929 = vadd.f32 %v796, %v928
    %v930 = vpop.f32.mrf.mxu0
    %v931 = vpop.f32.mrf.mxu0
    %v932 = vpop.f32.mrf.mxu0
    %933 = vdwg.mxu0
    %v934 = vmax.f32 %v929, 0.0
    %v935 = vpack.c.bf16 %v934, %v934
    %v936 = vld [vmem:[#allocation11] sm:$0xf]
    %v937 = vld [vmem:[#allocation11 + $0x4] sm:$0xf]
    %v938 = vld [vmem:[#allocation11 + $0x8] sm:$0xf]
    %v939 = vld [vmem:[#allocation11 + $0xc] sm:$0xf]
    %v940 = vld [vmem:[#allocation11 + $0x10] sm:$0xf]
    %v941 = vld [vmem:[#allocation11 + $0x14] sm:$0xf]
    %v942 = vld [vmem:[#allocation11 + $0x18] sm:$0xf]
    %v943 = vld [vmem:[#allocation11 + $0x1c] sm:$0xf]
    %v944 = vld [vmem:[#allocation11 + $0x20] sm:$0xf]
    %v945 = vld [vmem:[#allocation11 + $0x24] sm:$0xf]
    %v946 = vld [vmem:[#allocation11 + $0x28] sm:$0xf]
    %v947 = vld [vmem:[#allocation11 + $0x2c] sm:$0xf]
    %v948 = vld [vmem:[#allocation11 + $0x30] sm:$0xf]
    %v949 = vld [vmem:[#allocation11 + $0x34] sm:$0xf]
    %v950 = vld [vmem:[#allocation11 + $0x38] sm:$0xf]
    %v951 = vld [vmem:[#allocation11 + $0x3c] sm:$0xf]
    %v952 = vld [vmem:[%s8] sm:$0x1]
    %v954 = vlaneseq
    %v955 = vshrl.u32 %v954, 7
    %v956 = vsub.s32 0, %v955
    %v957 = vrot.slane %v952, %v956
    %v975 = vunpack.c.l.b16 %v936
    %v976 = vunpack.c.l.b16 %v937
    %v977 = vunpack.c.l.b16 %v938
    %v978 = vunpack.c.l.b16 %v939
    %v979 = vunpack.c.l.b16 %v940
    %v980 = vunpack.c.l.b16 %v941
    %v981 = vunpack.c.l.b16 %v942
    %v982 = vunpack.c.l.b16 %v943
    %v983 = vunpack.c.l.b16 %v944
    %v984 = vunpack.c.l.b16 %v945
    %v985 = vunpack.c.l.b16 %v946
    %v986 = vunpack.c.l.b16 %v947
    %v987 = vunpack.c.l.b16 %v948
    %v988 = vunpack.c.l.b16 %v949
    %v989 = vunpack.c.l.b16 %v950
    %v990 = vunpack.c.l.b16 %v951
    %v991 = vpack.c.b16 %v976, %v975
    %v992 = vpack.c.b16 %v978, %v977
    %v993 = vpack.c.b16 %v980, %v979
    %v994 = vpack.c.b16 %v982, %v981
    %v995 = vpack.c.b16 %v984, %v983
    %v996 = vpack.c.b16 %v986, %v985
    %v997 = vpack.c.b16 %v988, %v987
    %v998 = vpack.c.b16 %v990, %v989
    %1007 = vmatprep.subr.bf16.mxu0 0
    %1008 = vmatpush1.bf16.msra.mxu0 %v998
    %1009 = vmatprep.subr.bf16.mxu0 0
    %1010 = vmatpush1.bf16.msra.mxu0 %v997
    %1011 = vmatprep.subr.bf16.mxu0 0
    %1012 = vmatpush1.bf16.msra.mxu0 %v996
    %1013 = vmatprep.subr.bf16.mxu0 0
    %1014 = vmatpush1.bf16.msra.mxu0 %v995
    %1015 = vmatprep.subr.bf16.mxu0 0
    %1016 = vmatpush1.bf16.msra.mxu0 %v994
    %1017 = vmatprep.subr.bf16.mxu0 0
    %1018 = vmatpush1.bf16.msra.mxu0 %v993
    %1019 = vmatprep.subr.bf16.mxu0 0
    %1020 = vmatpush1.bf16.msra.mxu0 %v992
    %1021 = vmatprep.subr.bf16.mxu0 0
    %1022 = vmatpush1.bf16.msra.mxu0 %v991
    %1023 = vmatprep.subr.bf16.mxu0 0
    %1024 = vmatpush2.bf16.msra.mxu0 0
    %1025 = vmatprep.subr.bf16.mxu0 0
    %1026 = vmatpush2.bf16.msra.mxu0 0
    %1027 = vmatprep.subr.bf16.mxu0 0
    %1028 = vmatpush2.bf16.msra.mxu0 0
    %1029 = vmatprep.subr.bf16.mxu0 0
    %1030 = vmatpush2.bf16.msra.mxu0 0
    %1031 = vmatprep.subr.bf16.mxu0 0
    %1032 = vmatpush2.bf16.msra.mxu0 0
    %1033 = vmatprep.subr.bf16.mxu0 0
    %1034 = vmatpush2.bf16.msra.mxu0 0
    %1035 = vmatprep.subr.bf16.mxu0 0
    %1036 = vmatpush2.bf16.msra.mxu0 0
    %1037 = vmatprep.subr.bf16.mxu0 0
    %1038 = vmatpush2.bf16.msra.mxu0 0
    %1039 = vmatprep.mubr.bf16.mxu0 0
    %1040 = vmatmul.mubr.bf16.gmra.mxu0 %v935
    %v1041 = vpop.f32.mrf.mxu0
    %v1042 = vadd.f32 %v957, %v1041
    %v1043 = vpop.f32.mrf.mxu0
    %v1044 = vpop.f32.mrf.mxu0
    %v1045 = vpop.f32.mrf.mxu0
    %1046 = vdwg.mxu0
    %1047 = vst [vmem:[#allocation13] sm:$0xff] %v1042
    // Predicated region
    $region62: #{tpu_custom_call.1} parent=1 // pred_check
      _
    $region63: #{tpu_custom_call.1} parent=1 // pred_check_branch
      %1049 = sbr.rel (0) target = $region65
    $region64: #{tpu_custom_call.1} parent=1 // pred_region
      %s1051 = ssub.s32 128, 128
      %1052 = vsyncadd [#allocation4], %s1051
      %s1054 = sshll.u32 [#allocation13], 4
      %s1055 = int_to_ptr.vmem [resolvable:$true] %s1054
      %1057 = dma.vmem_to_hbm [thread:$0]  %s1055, 128, %s9, [#allocation4]
    $region65: #{tpu_custom_call.1} parent=1 // pred_fallthru
      _
    // Predicated region
    $region66: #{tpu_custom_call.1} parent=1 // pred_check
      _
    $region67: #{tpu_custom_call.1} parent=1 // pred_check_branch
      %1059 = sbr.rel (0) target = $region69
    $region68: #{tpu_custom_call.1} parent=1 // pred_region
      %1060 = dma.done [#allocation4], 128
    $region69: #{tpu_custom_call.1} parent=1 // pred_fallthru
      _
    %1061 = vsyncpa [#allocation3], 1
    %1062 = vsyncpa [#allocation6], 1
    %1063 = vsyncpa [#allocation9], 1
    %1064 = vsyncpa [#allocation12], 1
    %1065 = vsyncpa [#allocation4], 1

</llo_original>
